<compile_context>
chip_gen: v7x
topology: tpu7x:2x2x1
jax: 0.10.0
libtpu: 0.0.40
codegen_flags: <defaults>
</compile_context>

<pallas_src>
import functools

import jax
import jax.numpy as jnp
from jax.experimental import pallas as pl
from jax.experimental.pallas import tpu as pltpu

BN_EPS = 1e-5


def task_branch_kernel(x_ref, w1t_ref, b1_ref, gamma_ref, beta_ref,
                       w2t_ref, b2_ref, o_ref):
    """One grid step == one full task branch (whole batch resident in VMEM)."""
    # ---- fc1 + ReLU (MXU matmul, VPU max) --------------------------------
    h = jnp.dot(x_ref[...], w1t_ref[...],
                preferred_element_type=jnp.float32)            # [B, Hp] f32
    h = jnp.maximum(h + b1_ref[...], 0.0)

    # ---- BatchNorm1d, training mode: batch stats, biased variance --------
    # NOTE: the whole batch must be resident in this block; for large B this
    # should be restructured as a sum/sumsq accumulation over batch tiles
    # with an "arbitrary" reduction axis (see review).
    inv_b = 1.0 / h.shape[0]
    mean = jnp.sum(h, axis=0, keepdims=True) * inv_b           # [1, Hp]
    hc = h - mean
    var = jnp.sum(hc * hc, axis=0, keepdims=True) * inv_b      # [1, Hp]
    scale = gamma_ref[...] * jax.lax.rsqrt(var + BN_EPS)       # [1, Hp]
    shift = beta_ref[...] - mean * scale                       # [1, Hp]
    h_bn = h * scale + shift                                   # fused affine

    # ---- fc2 (MXU) --------------------------------------------------------
    y = jnp.dot(h_bn.astype(w2t_ref.dtype), w2t_ref[...],
                preferred_element_type=jnp.float32) + b2_ref[...]
    o_ref[...] = y.astype(o_ref.dtype)


def _round_up(n, m):
    return ((n + m - 1) // m) * m


def _pad_to(a, shape):
    pads = [(0, t - s) for s, t in zip(a.shape, shape)]
    if all(p == (0, 0) for p in pads):
        return a
    return jnp.pad(a, pads)


@functools.partial(jax.jit, static_argnames=("use_bf16",))
def task_branch_forward_batched(x, w1, b1, gamma, beta, w2, b2, *,
                                use_bf16=False):
    """Batched forward over G independent task branches.

    x:  [G, B, Din]          w1: [G, H, Din]   b1/gamma/beta: [G, H]
    w2: [G, O, H]            b2: [G, O]        returns [G, B, O] (f32)
    """
    G, B, Din = x.shape
    H = w1.shape[1]
    O = w2.shape[1]

    Dp = _round_up(Din, 128)
    Hp = _round_up(H, 128)
    Op = _round_up(O, 128)

    mxu_dtype = jnp.bfloat16 if use_bf16 else x.dtype

    # One-time layout plumbing outside the kernel: pre-transpose + lane pad.
    xp = _pad_to(x, (G, B, Dp)).astype(mxu_dtype)
    w1tp = _pad_to(jnp.transpose(w1, (0, 2, 1)), (G, Dp, Hp)).astype(mxu_dtype)
    w2tp = _pad_to(jnp.transpose(w2, (0, 2, 1)), (G, Hp, Op)).astype(mxu_dtype)
    b1p = _pad_to(b1[:, None, :], (G, 1, Hp))
    gammap = _pad_to(gamma[:, None, :], (G, 1, Hp))
    betap = _pad_to(beta[:, None, :], (G, 1, Hp))
    b2p = _pad_to(b2[:, None, :], (G, 1, Op))

    def spec(bshape):
        return pl.BlockSpec((None,) + bshape,
                            lambda g, _b=bshape: (g,) + (0,) * len(_b))

    flops = int(G * (2 * B * Dp * Hp + 2 * B * Hp * Op + 8 * B * Hp))
    bytes_accessed = int(
        sum(a.size * a.dtype.itemsize
            for a in (xp, w1tp, b1p, gammap, betap, w2tp, b2p))
        + G * B * Op * 4)

    out = pl.pallas_call(
        task_branch_kernel,
        out_shape=jax.ShapeDtypeStruct((G, B, Op), jnp.float32),
        grid=(G,),
        in_specs=[
            spec((B, Dp)),    # x
            spec((Dp, Hp)),   # w1^T
            spec((1, Hp)),    # b1
            spec((1, Hp)),    # gamma
            spec((1, Hp)),    # beta
            spec((Hp, Op)),   # w2^T
            spec((1, Op)),    # b2
        ],
        out_specs=spec((B, Op)),
        compiler_params=pltpu.CompilerParams(
            dimension_semantics=("parallel",)),  # shard branches over TCs (v7x)
        cost_estimate=pl.CostEstimate(
            flops=flops,
            transcendentals=int(G * Hp),
            bytes_accessed=bytes_accessed),
    )(xp, w1tp, b1p, gammap, betap, w2tp, b2p)

    return out[..., :O]


def task_branch_forward(x, w1, b1, gamma, beta, w2, b2, *, use_bf16=False):
    """Single-branch convenience wrapper (matches the PyTorch module call)."""
    # TODO(synk): BatchNorm1d running_mean/running_var updates (module state)
    # are not emitted; this reproduces only the forward output. B == 1 would
    # raise in PyTorch training mode, here it silently normalizes to beta.
    out = task_branch_forward_batched(
        x[None], w1[None], b1[None], gamma[None], beta[None],
        w2[None], b2[None], use_bf16=use_bf16)
    return out[0]


def reference_forward(x, w1, b1, gamma, beta, w2, b2):
    """Pure-JAX reference (batched over the branch axis)."""
    h = jnp.maximum(jnp.einsum("gbi,ghi->gbh", x, w1) + b1[:, None, :], 0.0)
    mean = jnp.mean(h, axis=1, keepdims=True)
    var = jnp.mean((h - mean) ** 2, axis=1, keepdims=True)
    h_bn = (h - mean) / jnp.sqrt(var + BN_EPS) * gamma[:, None, :] \
        + beta[:, None, :]
    return jnp.einsum("gbh,goh->gbo", h_bn, w2) + b2[:, None, :]


if __name__ == "__main__":
    # Small shapes consistent with the module; G independent branches batched
    # into a single pallas_call to amortize launch overhead.
    G, B, IN_NODES, HIDDEN_NODES, OUT_NODES = 4, 8, 32, 64, 16

    key = jax.random.PRNGKey(0)
    kx, k1, k2, k3, k4, k5, k6 = jax.random.split(key, 7)

    x = jax.random.normal(kx, (G, B, IN_NODES), jnp.float32)
    w1 = 0.1 * jax.random.normal(k1, (G, HIDDEN_NODES, IN_NODES), jnp.float32)
    b1 = 0.1 * jax.random.normal(k2, (G, HIDDEN_NODES), jnp.float32)
    gamma = 1.0 + 0.1 * jax.random.normal(k3, (G, HIDDEN_NODES), jnp.float32)
    beta = 0.1 * jax.random.normal(k4, (G, HIDDEN_NODES), jnp.float32)
    w2 = 0.1 * jax.random.normal(k5, (G, OUT_NODES, HIDDEN_NODES), jnp.float32)
    b2 = 0.1 * jax.random.normal(k6, (G, OUT_NODES), jnp.float32)

    ref = reference_forward(x, w1, b1, gamma, beta, w2, b2)

    # f32 path (all generations).
    out = task_branch_forward_batched(x, w1, b1, gamma, beta, w2, b2)
    jax.block_until_ready(out)
    assert out.shape == (G, B, OUT_NODES)
    assert jnp.allclose(out, ref, atol=1e-3, rtol=1e-3)

    # Single-branch path (module-equivalent call signature).
    out0 = task_branch_forward(x[0], w1[0], b1[0], gamma[0], beta[0],
                               w2[0], b2[0])
    jax.block_until_ready(out0)
    assert out0.shape == (B, OUT_NODES)
    assert jnp.allclose(out0, ref[0], atol=1e-3, rtol=1e-3)

    # bf16 MXU-input path (v6e/v7x); BN stats and accumulation stay f32.
    out_bf16 = task_branch_forward_batched(x, w1, b1, gamma, beta, w2, b2,
                                           use_bf16=True)
    jax.block_until_ready(out_bf16)
    rel_err = jnp.linalg.norm(out_bf16 - ref) / jnp.linalg.norm(ref)
    assert rel_err < 3e-2

    print("KERNEL_OK")
</pallas_src>

<mosaic_0001>
module attributes {stable_mosaic.version = 11 : i64} {
  func.func @task_branch_kernel(%arg0: i32, %arg1: memref<1x8x128xf32, #tpu.memory_space<vmem>>, %arg2: memref<1x128x128xf32, #tpu.memory_space<vmem>>, %arg3: memref<1x1x128xf32, #tpu.memory_space<vmem>>, %arg4: memref<1x1x128xf32, #tpu.memory_space<vmem>>, %arg5: memref<1x1x128xf32, #tpu.memory_space<vmem>>, %arg6: memref<1x128x128xf32, #tpu.memory_space<vmem>>, %arg7: memref<1x1x128xf32, #tpu.memory_space<vmem>>, %arg8: memref<1x8x128xf32, #tpu.memory_space<vmem>>) attributes {dimension_semantics = [#tpu.dimension_semantics<parallel>], iteration_bounds = array<i64: 4>, scalar_prefetch = 0 : i64, scratch_operands = 0 : i64, tpu.core_type = #tpu.core_type<tc>, window_params = [{transform_indices = @transform_0, window_bounds = array<i64: 1, 8, 128>}, {transform_indices = @transform_1, window_bounds = array<i64: 1, 128, 128>}, {transform_indices = @transform_2, window_bounds = array<i64: 1, 1, 128>}, {transform_indices = @transform_3, window_bounds = array<i64: 1, 1, 128>}, {transform_indices = @transform_4, window_bounds = array<i64: 1, 1, 128>}, {transform_indices = @transform_5, window_bounds = array<i64: 1, 128, 128>}, {transform_indices = @transform_6, window_bounds = array<i64: 1, 1, 128>}, {transform_indices = @transform_7, window_bounds = array<i64: 1, 8, 128>}]} {
    %c0 = arith.constant 0 : index
    %c0_0 = arith.constant 0 : index
    %c0_1 = arith.constant 0 : index
    %0 = vector.load %arg1[%c0, %c0_0, %c0_1] : memref<1x8x128xf32, #tpu.memory_space<vmem>>, vector<1x8x128xf32>
    %1 = vector.shape_cast %0 : vector<1x8x128xf32> to vector<8x128xf32>
    %c0_2 = arith.constant 0 : index
    %c0_3 = arith.constant 0 : index
    %c0_4 = arith.constant 0 : index
    %2 = vector.load %arg2[%c0_2, %c0_3, %c0_4] : memref<1x128x128xf32, #tpu.memory_space<vmem>>, vector<1x128x128xf32>
    %3 = vector.shape_cast %2 : vector<1x128x128xf32> to vector<128x128xf32>
    %cst = arith.constant dense<0.000000e+00> : vector<8x128xf32>
    %4 = tpu.matmul %1, %3, %cst {dimension_numbers = #tpu.dot_dimension_numbers<[1], [0], [0], [1], [0, 0, 1, 1], [], []>} : vector<8x128xf32>, vector<128x128xf32>, vector<8x128xf32> -> vector<8x128xf32>
    %c0_5 = arith.constant 0 : index
    %c0_6 = arith.constant 0 : index
    %c0_7 = arith.constant 0 : index
    %5 = vector.load %arg3[%c0_5, %c0_6, %c0_7] : memref<1x1x128xf32, #tpu.memory_space<vmem>>, vector<1x1x128xf32>
    %6 = vector.shape_cast %5 : vector<1x1x128xf32> to vector<1x128xf32>
    %7 = vector.broadcast %6 : vector<1x128xf32> to vector<8x128xf32>
    %8 = arith.addf %4, %7 : vector<8x128xf32>
    %cst_8 = arith.constant 0.000000e+00 : f32
    %9 = vector.broadcast %cst_8 : f32 to vector<8x128xf32>
    %10 = arith.maximumf %8, %9 : vector<8x128xf32>
    %cst_9 = arith.constant dense<0.000000e+00> : vector<128xf32>
    %11 = vector.multi_reduction <add>, %10, %cst_9 [0] : vector<8x128xf32> to vector<128xf32>
    %12 = vector.shape_cast %11 : vector<128xf32> to vector<1x128xf32>
    %cst_10 = arith.constant 1.250000e-01 : f32
    %13 = vector.broadcast %cst_10 : f32 to vector<1x128xf32>
    %14 = arith.mulf %12, %13 : vector<1x128xf32>
    %15 = vector.broadcast %14 : vector<1x128xf32> to vector<8x128xf32>
    %16 = arith.subf %10, %15 : vector<8x128xf32>
    %17 = arith.mulf %16, %16 : vector<8x128xf32>
    %cst_11 = arith.constant dense<0.000000e+00> : vector<128xf32>
    %18 = vector.multi_reduction <add>, %17, %cst_11 [0] : vector<8x128xf32> to vector<128xf32>
    %19 = vector.shape_cast %18 : vector<128xf32> to vector<1x128xf32>
    %cst_12 = arith.constant 1.250000e-01 : f32
    %20 = vector.broadcast %cst_12 : f32 to vector<1x128xf32>
    %21 = arith.mulf %19, %20 : vector<1x128xf32>
    %c0_13 = arith.constant 0 : index
    %c0_14 = arith.constant 0 : index
    %c0_15 = arith.constant 0 : index
    %22 = vector.load %arg4[%c0_13, %c0_14, %c0_15] : memref<1x1x128xf32, #tpu.memory_space<vmem>>, vector<1x1x128xf32>
    %23 = vector.shape_cast %22 : vector<1x1x128xf32> to vector<1x128xf32>
    %cst_16 = arith.constant 9.99999974E-6 : f32
    %24 = vector.broadcast %cst_16 : f32 to vector<1x128xf32>
    %25 = arith.addf %21, %24 : vector<1x128xf32>
    %26 = math.rsqrt %25 : vector<1x128xf32>
    %27 = arith.mulf %23, %26 : vector<1x128xf32>
    %c0_17 = arith.constant 0 : index
    %c0_18 = arith.constant 0 : index
    %c0_19 = arith.constant 0 : index
    %28 = vector.load %arg5[%c0_17, %c0_18, %c0_19] : memref<1x1x128xf32, #tpu.memory_space<vmem>>, vector<1x1x128xf32>
    %29 = vector.shape_cast %28 : vector<1x1x128xf32> to vector<1x128xf32>
    %30 = arith.mulf %14, %27 : vector<1x128xf32>
    %31 = arith.subf %29, %30 : vector<1x128xf32>
    %32 = vector.broadcast %27 : vector<1x128xf32> to vector<8x128xf32>
    %33 = arith.mulf %10, %32 : vector<8x128xf32>
    %34 = vector.broadcast %31 : vector<1x128xf32> to vector<8x128xf32>
    %35 = arith.addf %33, %34 : vector<8x128xf32>
    %c0_20 = arith.constant 0 : index
    %c0_21 = arith.constant 0 : index
    %c0_22 = arith.constant 0 : index
    %36 = vector.load %arg6[%c0_20, %c0_21, %c0_22] : memref<1x128x128xf32, #tpu.memory_space<vmem>>, vector<1x128x128xf32>
    %37 = vector.shape_cast %36 : vector<1x128x128xf32> to vector<128x128xf32>
    %cst_23 = arith.constant dense<0.000000e+00> : vector<8x128xf32>
    %38 = tpu.matmul %35, %37, %cst_23 {dimension_numbers = #tpu.dot_dimension_numbers<[1], [0], [0], [1], [0, 0, 1, 1], [], []>} : vector<8x128xf32>, vector<128x128xf32>, vector<8x128xf32> -> vector<8x128xf32>
    %c0_24 = arith.constant 0 : index
    %c0_25 = arith.constant 0 : index
    %c0_26 = arith.constant 0 : index
    %39 = vector.load %arg7[%c0_24, %c0_25, %c0_26] : memref<1x1x128xf32, #tpu.memory_space<vmem>>, vector<1x1x128xf32>
    %40 = vector.shape_cast %39 : vector<1x1x128xf32> to vector<1x128xf32>
    %41 = vector.broadcast %40 : vector<1x128xf32> to vector<8x128xf32>
    %42 = arith.addf %38, %41 : vector<8x128xf32>
    %c0_27 = arith.constant 0 : index
    %c0_28 = arith.constant 0 : index
    %c0_29 = arith.constant 0 : index
    %43 = vector.load %arg8[%c0_27, %c0_28, %c0_29] : memref<1x8x128xf32, #tpu.memory_space<vmem>>, vector<1x8x128xf32>
    %44 = vector.shape_cast %43 : vector<1x8x128xf32> to vector<8x128xf32>
    %45 = vector.shape_cast %42 : vector<8x128xf32> to vector<1x8x128xf32>
    tpu.vector_store %arg8[%c0_27, %c0_28, %c0_29], %45 {strides = array<i32>} : memref<1x8x128xf32, #tpu.memory_space<vmem>>, vector<1x8x128xf32>,
    return
  }
  func.func @transform_0(%arg0: i32) -> (i32, i32, i32) {
    %c0_i32 = arith.constant 0 : i32
    %c0_i32_0 = arith.constant 0 : i32
    %c0_i32_1 = arith.constant 0 : i32
    return %arg0, %c0_i32, %c0_i32_0 : i32, i32, i32
  }
  func.func @transform_1(%arg0: i32) -> (i32, i32, i32) {
    %c0_i32 = arith.constant 0 : i32
    %c0_i32_0 = arith.constant 0 : i32
    %c0_i32_1 = arith.constant 0 : i32
    return %arg0, %c0_i32, %c0_i32_0 : i32, i32, i32
  }
  func.func @transform_2(%arg0: i32) -> (i32, i32, i32) {
    %c0_i32 = arith.constant 0 : i32
    %c0_i32_0 = arith.constant 0 : i32
    %c0_i32_1 = arith.constant 0 : i32
    return %arg0, %c0_i32, %c0_i32_0 : i32, i32, i32
  }
  func.func @transform_3(%arg0: i32) -> (i32, i32, i32) {
    %c0_i32 = arith.constant 0 : i32
    %c0_i32_0 = arith.constant 0 : i32
    %c0_i32_1 = arith.constant 0 : i32
    return %arg0, %c0_i32, %c0_i32_0 : i32, i32, i32
  }
  func.func @transform_4(%arg0: i32) -> (i32, i32, i32) {
    %c0_i32 = arith.constant 0 : i32
    %c0_i32_0 = arith.constant 0 : i32
    %c0_i32_1 = arith.constant 0 : i32
    return %arg0, %c0_i32, %c0_i32_0 : i32, i32, i32
  }
  func.func @transform_5(%arg0: i32) -> (i32, i32, i32) {
    %c0_i32 = arith.constant 0 : i32
    %c0_i32_0 = arith.constant 0 : i32
    %c0_i32_1 = arith.constant 0 : i32
    return %arg0, %c0_i32, %c0_i32_0 : i32, i32, i32
  }
  func.func @transform_6(%arg0: i32) -> (i32, i32, i32) {
    %c0_i32 = arith.constant 0 : i32
    %c0_i32_0 = arith.constant 0 : i32
    %c0_i32_1 = arith.constant 0 : i32
    return %arg0, %c0_i32, %c0_i32_0 : i32, i32, i32
  }
  func.func @transform_7(%arg0: i32) -> (i32, i32, i32) {
    %c0_i32 = arith.constant 0 : i32
    %c0_i32_0 = arith.constant 0 : i32
    %c0_i32_1 = arith.constant 0 : i32
    return %arg0, %c0_i32, %c0_i32_0 : i32, i32, i32
  }
}

</mosaic_0001>

<llo_original>
// kernel: task_branch_forward_batched.1
$region0: #{task_branch_forward_batched.1}
  #allocation0 [shape = 'u32[]', space=smem, size = 0x4, offset = 0x4, fixed_abs, tag = 'smem constant byte address 0x4 - core index']
  #allocation1 [shape = 'u32[144,128]{1,0:T(1,128)}', space=vmem, size = 0x12000, scoped, tag = 'internal scratch']
  %s0 = inlined_call_operand.vmem [shape: f32[4,8,128], index: 0, kind: input, shape index: {}]
  %s1 = inlined_call_operand.vmem [shape: f32[4,128,128], index: 1, kind: input, shape index: {}]
  %s2 = inlined_call_operand.vmem [shape: f32[4,1,128], index: 2, kind: input, shape index: {}]
  %s3 = inlined_call_operand.vmem [shape: f32[4,1,128], index: 3, kind: input, shape index: {}]
  %s4 = inlined_call_operand.vmem [shape: f32[4,1,128], index: 4, kind: input, shape index: {}]
  %s5 = inlined_call_operand.vmem [shape: f32[4,128,128], index: 5, kind: input, shape index: {}]
  %s6 = inlined_call_operand.vmem [shape: f32[4,1,128], index: 6, kind: input, shape index: {}]
  %s7 = inlined_call_operand.hbm [shape: f32[4,8,128], index: 7, kind: output, shape index: {}]
  %s8 = sld [smem:[#allocation0]]
  $region61: #{task_branch_forward_batched.1} parent=0
    _
  %s10 = ssub.s32 1, %s8
  %s11 = scalar_select 0, %s10, %s8
  $region1: #{task_branch_forward_batched.1} parent=0
    #allocation2 [shape = 'u8[8192]{0}', space=vmem, size = 0x2000, scoped, tag = 'output window, operand 0']
    #allocation3 [shape = 's32[2]{0}', space=sflag, size = 0x8, scoped, tag = 'scoped memory for task_branch_forward_batched.1']
    %12 = vsyncpa [#allocation3], 0
    %s13 = scalar_lea.sflag [#allocation3], 1
    %14 = vsyncpa %s13, 0
    loop: start=0, step=1, limit=6
    $region2: #{task_branch_forward_batched.1} parent=1 // loop_pre_header
      _
    $region3: #{task_branch_forward_batched.1} parent=1 // loop_header
      %s16 = sphi 0, %s20
      %p17 = scmp.ge.s32.totalorder %s16, 6
      %s26 = sphi 0, %s28
      %s29 = sphi 0, %s26
      %s30 = sphi 0, %s29
      %s46 = sphi 0, %s30
      %s52 = sphi 0, %s54
      %s55 = sphi 0, %s52
      %s56 = sphi 0, %s55
      %s72 = sphi 0, %s56
      %s78 = sphi 0, %s80
      %s81 = sphi 0, %s78
      %s82 = sphi 0, %s81
      %s98 = sphi 0, %s82
      %s104 = sphi 0, %s106
      %s107 = sphi 0, %s104
      %s108 = sphi 0, %s107
      %s124 = sphi 0, %s108
      %s130 = sphi 0, %s132
      %s133 = sphi 0, %s130
      %s134 = sphi 0, %s133
      %s150 = sphi 0, %s134
      %s156 = sphi 0, %s158
      %s159 = sphi 0, %s156
      %s160 = sphi 0, %s159
      %s176 = sphi 0, %s160
      %s182 = sphi 0, %s184
      %s185 = sphi 0, %s182
      %s186 = sphi 0, %s185
      %s202 = sphi 0, %s186
      %s208 = sphi 0, %s210
      %s211 = sphi 0, %s208
      %s212 = sphi 0, %s211
      %s228 = sphi 0, %s212
    $region4: #{task_branch_forward_batched.1} parent=1 // loop_header_branch
      %19 = sbr.rel (%p17) target = $region8
    $region5: #{task_branch_forward_batched.1} parent=1 // loop_body
      %s21 = ssub.s32 %s16, 1
      %s22 = ssub.s32 %s16, 2
      %s23 = sadd.s32 %s16, 1
      %s24 = ssub.s32 %s16, %s23
      %p25 = scmp.eq.s32.totalorder %s24, 0
      %s27 = sadd.s32 %s26, 1
      %s28 = scalar_select %p25, %s26, %s27
      %p31 = pneg %p25
      %p32 = scmp.eq.s32.totalorder %s16, 3
      %p33 = por %p31, %p32
      %p34 = scmp.ne.s32.totalorder %s26, %s29
      %p35 = scmp.eq.s32.totalorder %s16, 0
      %p36 = por %p34, %p35
      %p37 = scmp.ne.s32.totalorder %s26, %s29
      %p38 = scmp.eq.s32.totalorder %s21, 3
      %p39 = por %p37, %p38
      %p40 = scmp.ne.s32.totalorder %s29, %s30
      %p41 = scmp.eq.s32.totalorder %s21, 0
      %p42 = por %p40, %p41
      %p43 = scmp.ne.s32.totalorder %s29, %s30
      %p44 = scmp.eq.s32.totalorder %s22, 3
      %p45 = por %p43, %p44
      %p47 = scmp.ne.s32.totalorder %s30, %s46
      %p48 = scmp.eq.s32.totalorder %s22, 0
      %p49 = por %p47, %p48
      %s50 = ssub.s32 %s16, %s23
      %p51 = scmp.eq.s32.totalorder %s50, 0
      %s53 = sadd.s32 %s52, 1
      %s54 = scalar_select %p51, %s52, %s53
      %p57 = pneg %p51
      %p58 = scmp.eq.s32.totalorder %s16, 3
      %p59 = por %p57, %p58
      %p60 = scmp.ne.s32.totalorder %s52, %s55
      %p61 = scmp.eq.s32.totalorder %s16, 0
      %p62 = por %p60, %p61
      %p63 = scmp.ne.s32.totalorder %s52, %s55
      %p64 = scmp.eq.s32.totalorder %s21, 3
      %p65 = por %p63, %p64
      %p66 = scmp.ne.s32.totalorder %s55, %s56
      %p67 = scmp.eq.s32.totalorder %s21, 0
      %p68 = por %p66, %p67
      %p69 = scmp.ne.s32.totalorder %s55, %s56
      %p70 = scmp.eq.s32.totalorder %s22, 3
      %p71 = por %p69, %p70
      %p73 = scmp.ne.s32.totalorder %s56, %s72
      %p74 = scmp.eq.s32.totalorder %s22, 0
      %p75 = por %p73, %p74
      %s76 = ssub.s32 %s16, %s23
      %p77 = scmp.eq.s32.totalorder %s76, 0
      %s79 = sadd.s32 %s78, 1
      %s80 = scalar_select %p77, %s78, %s79
      %p83 = pneg %p77
      %p84 = scmp.eq.s32.totalorder %s16, 3
      %p85 = por %p83, %p84
      %p86 = scmp.ne.s32.totalorder %s78, %s81
      %p87 = scmp.eq.s32.totalorder %s16, 0
      %p88 = por %p86, %p87
      %p89 = scmp.ne.s32.totalorder %s78, %s81
      %p90 = scmp.eq.s32.totalorder %s21, 3
      %p91 = por %p89, %p90
      %p92 = scmp.ne.s32.totalorder %s81, %s82
      %p93 = scmp.eq.s32.totalorder %s21, 0
      %p94 = por %p92, %p93
      %p95 = scmp.ne.s32.totalorder %s81, %s82
      %p96 = scmp.eq.s32.totalorder %s22, 3
      %p97 = por %p95, %p96
      %p99 = scmp.ne.s32.totalorder %s82, %s98
      %p100 = scmp.eq.s32.totalorder %s22, 0
      %p101 = por %p99, %p100
      %s102 = ssub.s32 %s16, %s23
      %p103 = scmp.eq.s32.totalorder %s102, 0
      %s105 = sadd.s32 %s104, 1
      %s106 = scalar_select %p103, %s104, %s105
      %p109 = pneg %p103
      %p110 = scmp.eq.s32.totalorder %s16, 3
      %p111 = por %p109, %p110
      %p112 = scmp.ne.s32.totalorder %s104, %s107
      %p113 = scmp.eq.s32.totalorder %s16, 0
      %p114 = por %p112, %p113
      %p115 = scmp.ne.s32.totalorder %s104, %s107
      %p116 = scmp.eq.s32.totalorder %s21, 3
      %p117 = por %p115, %p116
      %p118 = scmp.ne.s32.totalorder %s107, %s108
      %p119 = scmp.eq.s32.totalorder %s21, 0
      %p120 = por %p118, %p119
      %p121 = scmp.ne.s32.totalorder %s107, %s108
      %p122 = scmp.eq.s32.totalorder %s22, 3
      %p123 = por %p121, %p122
      %p125 = scmp.ne.s32.totalorder %s108, %s124
      %p126 = scmp.eq.s32.totalorder %s22, 0
      %p127 = por %p125, %p126
      %s128 = ssub.s32 %s16, %s23
      %p129 = scmp.eq.s32.totalorder %s128, 0
      %s131 = sadd.s32 %s130, 1
      %s132 = scalar_select %p129, %s130, %s131
      %p135 = pneg %p129
      %p136 = scmp.eq.s32.totalorder %s16, 3
      %p137 = por %p135, %p136
      %p138 = scmp.ne.s32.totalorder %s130, %s133
      %p139 = scmp.eq.s32.totalorder %s16, 0
      %p140 = por %p138, %p139
      %p141 = scmp.ne.s32.totalorder %s130, %s133
      %p142 = scmp.eq.s32.totalorder %s21, 3
      %p143 = por %p141, %p142
      %p144 = scmp.ne.s32.totalorder %s133, %s134
      %p145 = scmp.eq.s32.totalorder %s21, 0
      %p146 = por %p144, %p145
      %p147 = scmp.ne.s32.totalorder %s133, %s134
      %p148 = scmp.eq.s32.totalorder %s22, 3
      %p149 = por %p147, %p148
      %p151 = scmp.ne.s32.totalorder %s134, %s150
      %p152 = scmp.eq.s32.totalorder %s22, 0
      %p153 = por %p151, %p152
      %s154 = ssub.s32 %s16, %s23
      %p155 = scmp.eq.s32.totalorder %s154, 0
      %s157 = sadd.s32 %s156, 1
      %s158 = scalar_select %p155, %s156, %s157
      %p161 = pneg %p155
      %p162 = scmp.eq.s32.totalorder %s16, 3
      %p163 = por %p161, %p162
      %p164 = scmp.ne.s32.totalorder %s156, %s159
      %p165 = scmp.eq.s32.totalorder %s16, 0
      %p166 = por %p164, %p165
      %p167 = scmp.ne.s32.totalorder %s156, %s159
      %p168 = scmp.eq.s32.totalorder %s21, 3
      %p169 = por %p167, %p168
      %p170 = scmp.ne.s32.totalorder %s159, %s160
      %p171 = scmp.eq.s32.totalorder %s21, 0
      %p172 = por %p170, %p171
      %p173 = scmp.ne.s32.totalorder %s159, %s160
      %p174 = scmp.eq.s32.totalorder %s22, 3
      %p175 = por %p173, %p174
      %p177 = scmp.ne.s32.totalorder %s160, %s176
      %p178 = scmp.eq.s32.totalorder %s22, 0
      %p179 = por %p177, %p178
      %s180 = ssub.s32 %s16, %s23
      %p181 = scmp.eq.s32.totalorder %s180, 0
      %s183 = sadd.s32 %s182, 1
      %s184 = scalar_select %p181, %s182, %s183
      %p187 = pneg %p181
      %p188 = scmp.eq.s32.totalorder %s16, 3
      %p189 = por %p187, %p188
      %p190 = scmp.ne.s32.totalorder %s182, %s185
      %p191 = scmp.eq.s32.totalorder %s16, 0
      %p192 = por %p190, %p191
      %p193 = scmp.ne.s32.totalorder %s182, %s185
      %p194 = scmp.eq.s32.totalorder %s21, 3
      %p195 = por %p193, %p194
      %p196 = scmp.ne.s32.totalorder %s185, %s186
      %p197 = scmp.eq.s32.totalorder %s21, 0
      %p198 = por %p196, %p197
      %p199 = scmp.ne.s32.totalorder %s185, %s186
      %p200 = scmp.eq.s32.totalorder %s22, 3
      %p201 = por %p199, %p200
      %p203 = scmp.ne.s32.totalorder %s186, %s202
      %p204 = scmp.eq.s32.totalorder %s22, 0
      %p205 = por %p203, %p204
      %s206 = ssub.s32 %s16, %s23
      %p207 = scmp.eq.s32.totalorder %s206, 0
      %s209 = sadd.s32 %s208, 1
      %s210 = scalar_select %p207, %s208, %s209
      %p213 = pneg %p207
      %p214 = scmp.eq.s32.totalorder %s16, 3
      %p215 = por %p213, %p214
      %p216 = scmp.ne.s32.totalorder %s208, %s211
      %p217 = scmp.eq.s32.totalorder %s16, 0
      %p218 = por %p216, %p217
      %p219 = scmp.ne.s32.totalorder %s208, %s211
      %p220 = scmp.eq.s32.totalorder %s21, 3
      %p221 = por %p219, %p220
      %p222 = scmp.ne.s32.totalorder %s211, %s212
      %p223 = scmp.eq.s32.totalorder %s21, 0
      %p224 = por %p222, %p223
      %p225 = scmp.ne.s32.totalorder %s211, %s212
      %p226 = scmp.eq.s32.totalorder %s22, 3
      %p227 = por %p225, %p226
      %p229 = scmp.ne.s32.totalorder %s212, %s228
      %p230 = scmp.eq.s32.totalorder %s22, 0
      %p231 = por %p229, %p230
      %p232 = scmp.le.s32.totalorder 1, %s16
      %p233 = scmp.lt.s32.totalorder %s16, 5
      %p234 = pnand %p232, %p233
      %p235 = pneg %p234
      // Predicated region
      $region9: #{task_branch_forward_batched.1} parent=5 // pred_check
        _
      $region10: #{task_branch_forward_batched.1} parent=5 // pred_check_branch
        %237 = sbr.rel (%p234) target = $region12
      $region11: #{task_branch_forward_batched.1} parent=5 // pred_region
        %s238 = ssub.s32 %s16, 1
      $region12: #{task_branch_forward_batched.1} parent=5 // pred_fallthru
        _
      %p239 = scmp.lt.s32.totalorder %s16, 4
      // Predicated region
      $region13: #{task_branch_forward_batched.1} parent=5 // pred_check
        %p240 = pneg %p239
      $region14: #{task_branch_forward_batched.1} parent=5 // pred_check_branch
        %242 = sbr.rel (%p240) target = $region16
      $region15: #{task_branch_forward_batched.1} parent=5 // pred_region
        // Predicated region
        $region17: #{task_branch_forward_batched.1} parent=15 // pred_check
          %p243 = pneg %p36
        $region18: #{task_branch_forward_batched.1} parent=15 // pred_check_branch
          %245 = sbr.rel (%p243) target = $region20
        $region19: #{task_branch_forward_batched.1} parent=15 // pred_region
          %p246 = scmp.lt.s32.totalorder %s16, 3
          %s247 = scalar_select %p246, %s16, 3
          %s248 = smul.addr %s247, 8
          %s249 = scalar_lea.vmem %s0, %s248
        $region20: #{task_branch_forward_batched.1} parent=15 // pred_fallthru
          _
        // Predicated region
        $region21: #{task_branch_forward_batched.1} parent=15 // pred_check
          %p250 = pneg %p62
        $region22: #{task_branch_forward_batched.1} parent=15 // pred_check_branch
          %252 = sbr.rel (%p250) target = $region24
        $region23: #{task_branch_forward_batched.1} parent=15 // pred_region
          %p253 = scmp.lt.s32.totalorder %s16, 3
          %s254 = scalar_select %p253, %s16, 3
          %s255 = smul.addr %s254, 16
          %s256 = smul.addr %s255, 8
          %s257 = scalar_lea.vmem %s1, %s256
        $region24: #{task_branch_forward_batched.1} parent=15 // pred_fallthru
          _
        // Predicated region
        $region25: #{task_branch_forward_batched.1} parent=15 // pred_check
          %p258 = pneg %p88
        $region26: #{task_branch_forward_batched.1} parent=15 // pred_check_branch
          %260 = sbr.rel (%p258) target = $region28
        $region27: #{task_branch_forward_batched.1} parent=15 // pred_region
          %p261 = scmp.lt.s32.totalorder %s16, 3
          %s262 = scalar_select %p261, %s16, 3
          %s263 = scalar_lea.vmem %s2, %s262
        $region28: #{task_branch_forward_batched.1} parent=15 // pred_fallthru
          _
        // Predicated region
        $region29: #{task_branch_forward_batched.1} parent=15 // pred_check
          %p264 = pneg %p114
        $region30: #{task_branch_forward_batched.1} parent=15 // pred_check_branch
          %266 = sbr.rel (%p264) target = $region32
        $region31: #{task_branch_forward_batched.1} parent=15 // pred_region
          %p267 = scmp.lt.s32.totalorder %s16, 3
          %s268 = scalar_select %p267, %s16, 3
          %s269 = scalar_lea.vmem %s3, %s268
        $region32: #{task_branch_forward_batched.1} parent=15 // pred_fallthru
          _
        // Predicated region
        $region33: #{task_branch_forward_batched.1} parent=15 // pred_check
          %p270 = pneg %p140
        $region34: #{task_branch_forward_batched.1} parent=15 // pred_check_branch
          %272 = sbr.rel (%p270) target = $region36
        $region35: #{task_branch_forward_batched.1} parent=15 // pred_region
          %p273 = scmp.lt.s32.totalorder %s16, 3
          %s274 = scalar_select %p273, %s16, 3
          %s275 = scalar_lea.vmem %s4, %s274
        $region36: #{task_branch_forward_batched.1} parent=15 // pred_fallthru
          _
        // Predicated region
        $region37: #{task_branch_forward_batched.1} parent=15 // pred_check
          %p276 = pneg %p166
        $region38: #{task_branch_forward_batched.1} parent=15 // pred_check_branch
          %278 = sbr.rel (%p276) target = $region40
        $region39: #{task_branch_forward_batched.1} parent=15 // pred_region
          %p279 = scmp.lt.s32.totalorder %s16, 3
          %s280 = scalar_select %p279, %s16, 3
          %s281 = smul.addr %s280, 16
          %s282 = smul.addr %s281, 8
          %s283 = scalar_lea.vmem %s5, %s282
        $region40: #{task_branch_forward_batched.1} parent=15 // pred_fallthru
          _
        // Predicated region
        $region41: #{task_branch_forward_batched.1} parent=15 // pred_check
          %p284 = pneg %p192
        $region42: #{task_branch_forward_batched.1} parent=15 // pred_check_branch
          %286 = sbr.rel (%p284) target = $region44
        $region43: #{task_branch_forward_batched.1} parent=15 // pred_region
          %p287 = scmp.lt.s32.totalorder %s16, 3
          %s288 = scalar_select %p287, %s16, 3
          %s289 = scalar_lea.vmem %s6, %s288
        $region44: #{task_branch_forward_batched.1} parent=15 // pred_fallthru
          _
      $region16: #{task_branch_forward_batched.1} parent=5 // pred_fallthru
        _
      %p290 = scmp.le.s32.totalorder 1, %s16
      %p291 = scmp.lt.s32.totalorder %s16, 5
      %p292 = pnand %p290, %p291
      %p293 = pneg %p292
      // Predicated region
      $region45: #{task_branch_forward_batched.1} parent=5 // pred_check
        _
      $region46: #{task_branch_forward_batched.1} parent=5 // pred_check_branch
        %295 = sbr.rel (%p292) target = $region48
      $region47: #{task_branch_forward_batched.1} parent=5 // pred_region
        %s296 = ssub.s32 %s16, 1
        %p297 = scmp.lt.s32.totalorder %s21, 3
        %s298 = scalar_select %p297, %s21, 3
        %s299 = smul.addr %s298, 8
        %s300 = scalar_lea.vmem %s0, %s299
        %p301 = pneg %p42
        %p302 = pneg %p39
        %p303 = scmp.lt.s32.totalorder %s21, 3
        %s304 = scalar_select %p303, %s21, 3
        %s305 = smul.addr %s304, 16
        %s306 = smul.addr %s305, 8
        %s307 = scalar_lea.vmem %s1, %s306
        %p308 = pneg %p68
        %p309 = pneg %p65
        %p310 = scmp.lt.s32.totalorder %s21, 3
        %s311 = scalar_select %p310, %s21, 3
        %s312 = scalar_lea.vmem %s2, %s311
        %p313 = pneg %p94
        %p314 = pneg %p91
        %p315 = scmp.lt.s32.totalorder %s21, 3
        %s316 = scalar_select %p315, %s21, 3
        %s317 = scalar_lea.vmem %s3, %s316
        %p318 = pneg %p120
        %p319 = pneg %p117
        %p320 = scmp.lt.s32.totalorder %s21, 3
        %s321 = scalar_select %p320, %s21, 3
        %s322 = scalar_lea.vmem %s4, %s321
        %p323 = pneg %p146
        %p324 = pneg %p143
        %p325 = scmp.lt.s32.totalorder %s21, 3
        %s326 = scalar_select %p325, %s21, 3
        %s327 = smul.addr %s326, 16
        %s328 = smul.addr %s327, 8
        %s329 = scalar_lea.vmem %s5, %s328
        %p330 = pneg %p172
        %p331 = pneg %p169
        %p332 = scmp.lt.s32.totalorder %s21, 3
        %s333 = scalar_select %p332, %s21, 3
        %s334 = scalar_lea.vmem %s6, %s333
        %p335 = pneg %p198
        %p336 = pneg %p195
        %p337 = pneg %p224
        %p338 = pneg %p221
        %s339 = sand.u32 %s211, 1
        %s340 = scalar_lea.sflag [#allocation3], %s339
        %s341 = sand.u32 %s211, 1
        %s342 = smul.addr %s341, 8
        %s343 = scalar_lea.vmem [#allocation2], %s342
        %p344 = scmp.lt.s32.totalorder %s21, 3
        %s345 = scalar_select %p344, %s21, 3
        %s346 = smul.addr %s345, 8
        %s347 = scalar_lea.vmem %s0, %s346
        %p348 = scmp.lt.s32.totalorder %s21, 3
        %s349 = scalar_select %p348, %s21, 3
        %s350 = smul.addr %s349, 16
        %s351 = smul.addr %s350, 8
        %s352 = scalar_lea.vmem %s1, %s351
        %p353 = scmp.lt.s32.totalorder %s21, 3
        %s354 = scalar_select %p353, %s21, 3
        %s355 = scalar_lea.vmem %s2, %s354
        %p356 = scmp.lt.s32.totalorder %s21, 3
        %s357 = scalar_select %p356, %s21, 3
        %s358 = scalar_lea.vmem %s3, %s357
        %p359 = scmp.lt.s32.totalorder %s21, 3
        %s360 = scalar_select %p359, %s21, 3
        %s361 = scalar_lea.vmem %s4, %s360
        %p362 = scmp.lt.s32.totalorder %s21, 3
        %s363 = scalar_select %p362, %s21, 3
        %s364 = smul.addr %s363, 16
        %s365 = smul.addr %s364, 8
        %s366 = scalar_lea.vmem %s5, %s365
        %p367 = scmp.lt.s32.totalorder %s21, 3
        %s368 = scalar_select %p367, %s21, 3
        %s369 = scalar_lea.vmem %s6, %s368
        %v370 = vld [vmem:[%s347] sm:$0xff]
        %v371 = vld [vmem:[%s352] sm:$0xff]
        %v372 = vld [vmem:[%s352 + $0x8] sm:$0xff]
        %v373 = vld [vmem:[%s352 + $0x10] sm:$0xff]
        %v374 = vld [vmem:[%s352 + $0x18] sm:$0xff]
        %v375 = vld [vmem:[%s352 + $0x20] sm:$0xff]
        %v376 = vld [vmem:[%s352 + $0x28] sm:$0xff]
        %v377 = vld [vmem:[%s352 + $0x30] sm:$0xff]
        %v378 = vld [vmem:[%s352 + $0x38] sm:$0xff]
        %v379 = vld [vmem:[%s352 + $0x40] sm:$0xff]
        %v380 = vld [vmem:[%s352 + $0x48] sm:$0xff]
        %v381 = vld [vmem:[%s352 + $0x50] sm:$0xff]
        %v382 = vld [vmem:[%s352 + $0x58] sm:$0xff]
        %v383 = vld [vmem:[%s352 + $0x60] sm:$0xff]
        %v384 = vld [vmem:[%s352 + $0x68] sm:$0xff]
        %v385 = vld [vmem:[%s352 + $0x70] sm:$0xff]
        %v386 = vld [vmem:[%s352 + $0x78] sm:$0xff]
        %v387 = vld [vmem:[%s355] sm:$0x1]
        %v389 = vlaneseq
        %v390 = vshrl.u32 %v389, 7
        %v391 = vsub.s32 0, %v390
        %v392 = vrot.slane %v387, %v391
        %394 = vmatprep.subr.mxu0 0.0
        %395 = vmatpush1.msra.mxu0 %v371
        %396 = vmatprep.subr.mxu0 0.0
        %397 = vmatpush1.msra.mxu0 %v372
        %398 = vmatprep.subr.mxu0 0.0
        %399 = vmatpush1.msra.mxu0 %v373
        %400 = vmatprep.subr.mxu0 0.0
        %401 = vmatpush1.msra.mxu0 %v374
        %402 = vmatprep.subr.mxu0 0.0
        %403 = vmatpush1.msra.mxu0 %v375
        %404 = vmatprep.subr.mxu0 0.0
        %405 = vmatpush1.msra.mxu0 %v376
        %406 = vmatprep.subr.mxu0 0.0
        %407 = vmatpush1.msra.mxu0 %v377
        %408 = vmatprep.subr.mxu0 0.0
        %409 = vmatpush1.msra.mxu0 %v378
        %410 = vmatprep.subr.mxu0 0.0
        %411 = vmatpush1.msra.mxu0 %v379
        %412 = vmatprep.subr.mxu0 0.0
        %413 = vmatpush1.msra.mxu0 %v380
        %414 = vmatprep.subr.mxu0 0.0
        %415 = vmatpush1.msra.mxu0 %v381
        %416 = vmatprep.subr.mxu0 0.0
        %417 = vmatpush1.msra.mxu0 %v382
        %418 = vmatprep.subr.mxu0 0.0
        %419 = vmatpush1.msra.mxu0 %v383
        %420 = vmatprep.subr.mxu0 0.0
        %421 = vmatpush1.msra.mxu0 %v384
        %422 = vmatprep.subr.mxu0 0.0
        %423 = vmatpush1.msra.mxu0 %v385
        %424 = vmatprep.subr.mxu0 0.0
        %425 = vmatpush1.msra.mxu0 %v386
        %426 = vmatprep.subr.mxu0 0.0
        %427 = vmatpush1.msra.mxu0 0.0
        %428 = vmatprep.subr.mxu0 0.0
        %429 = vmatpush1.msra.mxu0 0.0
        %430 = vmatprep.subr.mxu0 0.0
        %431 = vmatpush1.msra.mxu0 0.0
        %432 = vmatprep.subr.mxu0 0.0
        %433 = vmatpush1.msra.mxu0 0.0
        %434 = vmatprep.subr.mxu0 0.0
        %435 = vmatpush1.msra.mxu0 0.0
        %436 = vmatprep.subr.mxu0 0.0
        %437 = vmatpush1.msra.mxu0 0.0
        %438 = vmatprep.subr.mxu0 0.0
        %439 = vmatpush1.msra.mxu0 0.0
        %440 = vmatprep.subr.mxu0 0.0
        %441 = vmatpush1.msra.mxu0 0.0
        %442 = vmatprep.subr.mxu0 0.0
        %443 = vmatpush1.msra.mxu0 0.0
        %444 = vmatprep.subr.mxu0 0.0
        %445 = vmatpush1.msra.mxu0 0.0
        %446 = vmatprep.subr.mxu0 0.0
        %447 = vmatpush1.msra.mxu0 0.0
        %448 = vmatprep.subr.mxu0 0.0
        %449 = vmatpush1.msra.mxu0 0.0
        %450 = vmatprep.subr.mxu0 0.0
        %451 = vmatpush1.msra.mxu0 0.0
        %452 = vmatprep.subr.mxu0 0.0
        %453 = vmatpush1.msra.mxu0 0.0
        %454 = vmatprep.subr.mxu0 0.0
        %455 = vmatpush1.msra.mxu0 0.0
        %456 = vmatprep.subr.mxu0 0.0
        %457 = vmatpush1.msra.mxu0 0.0
        %458 = vmatprep.mubr.f32.mxu0 0.0
        %459 = vmatmul.mubr.f32.gmra.mrb[0].mxu0 %v370
        %v460 = vpop.f32.mrb[0].mxu0
        %v461 = vadd.f32 %v392, %v460
        %v462 = vpop.f32.mrb[0].mxu0
        %463 = vdwg.mxu0
        %v464 = vmax.f32 %v461, 0.0
        %v465 = vrot.slane %v464, 4
        %v466 = vadd.f32 %v464, %v465
        %v467 = vrot.slane %v466, 2
        %v468 = vadd.f32 %v466, %v467
        %v469 = vrot.slane %v468, 1
        %v470 = vadd.f32 %v468, %v469
        %v471 = vmul.f32 %v470, 0.125
        %v472 = vsub.f32 %v464, %v471
        %v473 = vmul.f32 %v472, %v472
        %v474 = vrot.slane %v473, 4
        %v475 = vadd.f32 %v473, %v474
        %v476 = vrot.slane %v475, 2
        %v477 = vadd.f32 %v475, %v476
        %v478 = vrot.slane %v477, 1
        %v479 = vadd.f32 %v477, %v478
        %v480 = vmul.f32 %v479, 0.125
        %v481 = vld [vmem:[%s358] sm:$0x1]
        %v482 = vadd.f32 %v480, 1e-05
        %v483 = vrsqrt.pop %v482
        %v484 = vmul.f32 %v481, %v483
        %v485 = vld [vmem:[%s361] sm:$0x1]
        %v486 = vmul.f32 %v471, %v484
        %v487 = vsub.f32 %v485, %v486
        %v489 = vlaneseq
        %v490 = vshrl.u32 %v489, 7
        %v491 = vsub.s32 0, %v490
        %v492 = vrot.slane %v484, %v491
        %v494 = vmul.f32 %v464, %v492
        %v496 = vlaneseq
        %v497 = vshrl.u32 %v496, 7
        %v498 = vsub.s32 0, %v497
        %v499 = vrot.slane %v487, %v498
        %v501 = vadd.f32 %v494, %v499
        %v502 = vld [vmem:[%s366] sm:$0xff]
        %v503 = vld [vmem:[%s366 + $0x8] sm:$0xff]
        %v504 = vld [vmem:[%s366 + $0x10] sm:$0xff]
        %v505 = vld [vmem:[%s366 + $0x18] sm:$0xff]
        %v506 = vld [vmem:[%s366 + $0x20] sm:$0xff]
        %v507 = vld [vmem:[%s366 + $0x28] sm:$0xff]
        %v508 = vld [vmem:[%s366 + $0x30] sm:$0xff]
        %v509 = vld [vmem:[%s366 + $0x38] sm:$0xff]
        %v510 = vld [vmem:[%s366 + $0x40] sm:$0xff]
        %v511 = vld [vmem:[%s366 + $0x48] sm:$0xff]
        %v512 = vld [vmem:[%s366 + $0x50] sm:$0xff]
        %v513 = vld [vmem:[%s366 + $0x58] sm:$0xff]
        %v514 = vld [vmem:[%s366 + $0x60] sm:$0xff]
        %v515 = vld [vmem:[%s366 + $0x68] sm:$0xff]
        %v516 = vld [vmem:[%s366 + $0x70] sm:$0xff]
        %v517 = vld [vmem:[%s366 + $0x78] sm:$0xff]
        %v518 = vld [vmem:[%s369] sm:$0x1]
        %v520 = vlaneseq
        %v521 = vshrl.u32 %v520, 7
        %v522 = vsub.s32 0, %v521
        %v523 = vrot.slane %v518, %v522
        %525 = vmatprep.subr.mxu0 0.0
        %526 = vmatpush1.msra.mxu0 %v502
        %527 = vmatprep.subr.mxu0 0.0
        %528 = vmatpush1.msra.mxu0 %v503
        %529 = vmatprep.subr.mxu0 0.0
        %530 = vmatpush1.msra.mxu0 %v504
        %531 = vmatprep.subr.mxu0 0.0
        %532 = vmatpush1.msra.mxu0 %v505
        %533 = vmatprep.subr.mxu0 0.0
        %534 = vmatpush1.msra.mxu0 %v506
        %535 = vmatprep.subr.mxu0 0.0
        %536 = vmatpush1.msra.mxu0 %v507
        %537 = vmatprep.subr.mxu0 0.0
        %538 = vmatpush1.msra.mxu0 %v508
        %539 = vmatprep.subr.mxu0 0.0
        %540 = vmatpush1.msra.mxu0 %v509
        %541 = vmatprep.subr.mxu0 0.0
        %542 = vmatpush1.msra.mxu0 %v510
        %543 = vmatprep.subr.mxu0 0.0
        %544 = vmatpush1.msra.mxu0 %v511
        %545 = vmatprep.subr.mxu0 0.0
        %546 = vmatpush1.msra.mxu0 %v512
        %547 = vmatprep.subr.mxu0 0.0
        %548 = vmatpush1.msra.mxu0 %v513
        %549 = vmatprep.subr.mxu0 0.0
        %550 = vmatpush1.msra.mxu0 %v514
        %551 = vmatprep.subr.mxu0 0.0
        %552 = vmatpush1.msra.mxu0 %v515
        %553 = vmatprep.subr.mxu0 0.0
        %554 = vmatpush1.msra.mxu0 %v516
        %555 = vmatprep.subr.mxu0 0.0
        %556 = vmatpush1.msra.mxu0 %v517
        %557 = vmatprep.subr.mxu0 0.0
        %558 = vmatpush1.msra.mxu0 0.0
        %559 = vmatprep.subr.mxu0 0.0
        %560 = vmatpush1.msra.mxu0 0.0
        %561 = vmatprep.subr.mxu0 0.0
        %562 = vmatpush1.msra.mxu0 0.0
        %563 = vmatprep.subr.mxu0 0.0
        %564 = vmatpush1.msra.mxu0 0.0
        %565 = vmatprep.subr.mxu0 0.0
        %566 = vmatpush1.msra.mxu0 0.0
        %567 = vmatprep.subr.mxu0 0.0
        %568 = vmatpush1.msra.mxu0 0.0
        %569 = vmatprep.subr.mxu0 0.0
        %570 = vmatpush1.msra.mxu0 0.0
        %571 = vmatprep.subr.mxu0 0.0
        %572 = vmatpush1.msra.mxu0 0.0
        %573 = vmatprep.subr.mxu0 0.0
        %574 = vmatpush1.msra.mxu0 0.0
        %575 = vmatprep.subr.mxu0 0.0
        %576 = vmatpush1.msra.mxu0 0.0
        %577 = vmatprep.subr.mxu0 0.0
        %578 = vmatpush1.msra.mxu0 0.0
        %579 = vmatprep.subr.mxu0 0.0
        %580 = vmatpush1.msra.mxu0 0.0
        %581 = vmatprep.subr.mxu0 0.0
        %582 = vmatpush1.msra.mxu0 0.0
        %583 = vmatprep.subr.mxu0 0.0
        %584 = vmatpush1.msra.mxu0 0.0
        %585 = vmatprep.subr.mxu0 0.0
        %586 = vmatpush1.msra.mxu0 0.0
        %587 = vmatprep.subr.mxu0 0.0
        %588 = vmatpush1.msra.mxu0 0.0
        %589 = vmatprep.mubr.f32.mxu0 0.0
        %590 = vmatmul.mubr.f32.gmra.mrb[0].mxu0 %v501
        %v591 = vpop.f32.mrb[0].mxu0
        %v592 = vadd.f32 %v523, %v591
        %v593 = vpop.f32.mrb[0].mxu0
        %594 = vdwg.mxu0
        %595 = vst [vmem:[%s343] sm:$0xff] %v592
        %s596 = sand.u32 %s211, 1
        %s597 = scalar_lea.sflag [#allocation3], %s596
        %s598 = sand.u32 %s211, 1
        %s599 = smul.addr %s598, 8
        %s600 = scalar_lea.vmem [#allocation2], %s599
        // Predicated region
        $region49: #{task_branch_forward_batched.1} parent=47 // pred_check
          %p601 = pneg %p221
        $region50: #{task_branch_forward_batched.1} parent=47 // pred_check_branch
          %603 = sbr.rel (%p601) target = $region52
        $region51: #{task_branch_forward_batched.1} parent=47 // pred_region
          %s605 = ssub.s32 128, 128
          %606 = vsyncadd %s597, %s605
          %s607 = smul.addr %s21, 128
          %s608 = scalar_lea.hbm %s7, %s607
          %s610 = sshll.u32 %s600, 4
          %s611 = int_to_ptr.vmem [resolvable:$true] %s610
          %613 = dma.vmem_to_hbm [thread:$0]  %s611, 128, %s608, %s597
        $region52: #{task_branch_forward_batched.1} parent=47 // pred_fallthru
          _
      $region48: #{task_branch_forward_batched.1} parent=5 // pred_fallthru
        _
      %p614 = scmp.le.s32.totalorder 2, %s16
      // Predicated region
      $region53: #{task_branch_forward_batched.1} parent=5 // pred_check
        %p615 = pneg %p614
      $region54: #{task_branch_forward_batched.1} parent=5 // pred_check_branch
        %617 = sbr.rel (%p615) target = $region56
      $region55: #{task_branch_forward_batched.1} parent=5 // pred_region
        %s618 = ssub.s32 %s16, 2
        // Predicated region
        $region57: #{task_branch_forward_batched.1} parent=55 // pred_check
          %p619 = pneg %p227
        $region58: #{task_branch_forward_batched.1} parent=55 // pred_check_branch
          %621 = sbr.rel (%p619) target = $region60
        $region59: #{task_branch_forward_batched.1} parent=55 // pred_region
          %s622 = sand.u32 %s212, 1
          %s623 = scalar_lea.sflag [#allocation3], %s622
          %s624 = sand.u32 %s212, 1
          %s625 = smul.addr %s624, 8
          %s626 = scalar_lea.vmem [#allocation2], %s625
          %627 = dma.done %s623, 128
        $region60: #{task_branch_forward_batched.1} parent=55 // pred_fallthru
          _
      $region56: #{task_branch_forward_batched.1} parent=5 // pred_fallthru
        _
    $region6: #{task_branch_forward_batched.1} parent=1 // loop_footer
      %s20 = sadd.s32 1, %s16
    $region7: #{task_branch_forward_batched.1} parent=1 // loop_footer_branch
      %15 = sbr.rel target = $region3
    $region8: #{task_branch_forward_batched.1} parent=1 // loop_exit
      _
    %628 = vsyncpa [#allocation3], 1
    %s629 = scalar_lea.sflag [#allocation3], 1
    %630 = vsyncpa %s629, 1

</llo_original>
